<compile_context>
chip_gen: v7x
topology: tpu7x:2x2x1
jax: 0.10.0
libtpu: 0.0.40
codegen_flags: <defaults>
</compile_context>

<pallas_src>
import functools

import jax
import jax.numpy as jnp
from jax.experimental import pallas as pl
from jax.experimental.pallas import tpu as pltpu

# spike_args (deterministic, typical e-prop values)
THRESH = 0.5
DECAY = 0.2
# LENS (surrogate-gradient width) only affects the backward pass.


def _round_up(x, m):
    return (x + m - 1) // m * m


def _largest_divisor_leq(n, cap):
    cap = max(1, min(n, cap))
    for d in range(cap, 0, -1):
        if n % d == 0:
            return d
    return 1


def _default_min_out_tiles():
    """>=2 parallel out-tiles on chips with 2 TensorCores (v7x), else 1."""
    try:
        kind = jax.devices()[0].device_kind.lower()
    except Exception:
        return 1
    return 2 if "v7" in kind else 1


def _fc_lif_chunk_kernel(x_ref, w_ref, b_ref,
                         spikes_ref, sumspike_ref,
                         mem_sc, *, thresh, decay, tc, x_windowed):
    """One grid step = Tc timesteps of the LIF recurrence for one out tile."""
    c = pl.program_id(1)

    # Reset membrane / sumspike state at the start of the window (per out tile).
    @pl.when(c == 0)
    def _():
        mem_sc[...] = jnp.zeros_like(mem_sc)
        sumspike_ref[...] = jnp.zeros_like(sumspike_ref)

    # Load the Tc-step x chunk.
    if x_windowed:
        # x block holds the whole window (fetched from HBM once); slice chunk.
        start = pl.multiple_of(c * tc, tc)
        x = x_ref[pl.ds(start, tc)]                  # (tc, b_pad, in_pad)
    else:
        x = x_ref[...]                               # (tc, b_pad, in_pad)
    n_steps, b_rows, k = x.shape                     # static
    n_out = w_ref.shape[1]

    # ONE MXU matmul for all Tc timesteps (M = tc * b_pad rows); f32 accumulate.
    y = jnp.dot(x.reshape(n_steps * b_rows, k), w_ref[...],
                preferred_element_type=jnp.float32)
    y = (y + b_ref[...]).reshape(n_steps, b_rows, n_out)   # bias add in f32

    # LIF recurrence over the chunk, fully unrolled (tc is static).
    mem = mem_sc[...]
    spike = (mem > thresh).astype(jnp.float32)       # == previous spike (0 at t==0)
    sums = sumspike_ref[...]
    for s in range(tc):
        mem = mem * (decay * (1.0 - spike)) + y[s]
        spike = (mem > thresh).astype(jnp.float32)
        sums = sums + spike
        spikes_ref[s] = spike.astype(spikes_ref.dtype)   # lane-dense store
    mem_sc[...] = mem
    sumspike_ref[...] = sums


def fc_block_forward(xs, w, b, *, thresh=THRESH, decay=DECAY,
                     compute_dtype=jnp.bfloat16,
                     spikes_dtype=jnp.float32,
                     min_out_tiles=None,
                     vmem_budget_bytes=48 * 1024 * 1024):
    """Run FC_block over a full spike window in one fused Pallas kernel.

    xs: (spike_window, B, in_features) inputs (one per forward call).
    w:  (out_features, in_features)  (nn.Linear layout)
    b:  (out_features,) or (1, out_features)
    Returns (spikes_per_step, sumspike); spikes_per_step[t] is what
    FC_block.forward returns at timestep t (TrainingHook forward == identity).

    compute_dtype: dtype fed to the MXU for x/W (bf16 default; accumulation,
      bias and LIF state math stay f32).  Use jnp.float32 for a bit-exact match
      of the f32 reference.
    spikes_dtype: dtype of the per-step spike output (values are exactly 0/1,
      so bf16 is lossless and halves the dominant HBM write stream).
    """
    T, B, in_features = xs.shape
    out_features = w.shape[0]

    cdsize = jnp.dtype(compute_dtype).itemsize
    sdsize = jnp.dtype(spikes_dtype).itemsize

    # Pad to TPU-native tile sizes: sublane multiple of 8 (16 for packed bf16),
    # lane multiple of 128.
    b_mult = 16 if cdsize < 4 else 8
    b_pad = _round_up(max(B, 1), b_mult)
    in_pad = _round_up(in_features, 128)
    out_pad = _round_up(out_features, 128)

    # --- Time chunking: Tc timesteps per grid step (fattens the MXU M dim). ---
    rows_cap = 512                                   # Tc * b_pad rows per matmul
    tc_cap = max(1, rows_cap // b_pad)
    tc_cap = min(tc_cap,
                 max(1, (4 * 1024 * 1024) // (b_pad * in_pad * cdsize)))
    tc = _largest_divisor_leq(T, tc_cap)
    n_chunks = T // tc

    # --- out_features tiling / VMEM budgeting. ---
    if min_out_tiles is None:
        min_out_tiles = _default_min_out_tiles()

    def vmem_bytes(out_tile, x_windowed):
        x_rows = T if x_windowed else tc
        return (2 * x_rows * b_pad * in_pad * cdsize      # x (double-buffered)
                + 2 * in_pad * out_tile * cdsize          # resident W
                + 2 * out_pad * 4                         # bias
                + 2 * tc * b_pad * out_tile * sdsize      # spikes out block
                + 2 * b_pad * out_tile * 4                # sumspike out block
                + b_pad * out_tile * 4                    # mem scratch
                + tc * b_pad * out_tile * 4)              # y temporaries (rough)

    candidates = [d for d in range(out_pad, 127, -128) if out_pad % d == 0]
    fitting = [c for c in candidates if vmem_bytes(c, False) <= vmem_budget_bytes]
    preferred = [c for c in fitting if out_pad // c >= min_out_tiles]
    if preferred:
        out_tile = preferred[0]        # widest tile that still uses all cores
    elif fitting:
        out_tile = fitting[0]          # widest tile that fits VMEM
    else:
        out_tile = candidates[-1]      # 128 (minimum lane-aligned tile)
    n_tiles = out_pad // out_tile

    # If x would be re-streamed once per out tile, keep the whole window
    # resident in VMEM instead (fetched from HBM exactly once).
    x_windowed = (n_tiles > 1
                  and vmem_bytes(out_tile, True) <= vmem_budget_bytes)

    # --- Lay out operands once (pad ONLY when not already aligned). ---
    if (B, in_features) != (b_pad, in_pad):
        xs = jnp.pad(xs, ((0, 0), (0, b_pad - B), (0, in_pad - in_features)))
    xs_p = xs.astype(compute_dtype)

    w_t = jnp.transpose(w)                                   # (in, out) MXU layout
    if (in_features, out_features) != (in_pad, out_pad):
        w_t = jnp.pad(w_t, ((0, in_pad - in_features), (0, out_pad - out_features)))
    w_t = w_t.astype(compute_dtype)

    b_p = jnp.reshape(b, (1, out_features)).astype(jnp.float32)
    if out_features != out_pad:
        b_p = jnp.pad(b_p, ((0, 0), (0, out_pad - out_features)))

    kernel = functools.partial(_fc_lif_chunk_kernel, thresh=thresh, decay=decay,
                               tc=tc, x_windowed=x_windowed)

    if x_windowed:
        x_spec = pl.BlockSpec((T, b_pad, in_pad), lambda n, c: (0, 0, 0))
    else:
        x_spec = pl.BlockSpec((tc, b_pad, in_pad), lambda n, c: (c, 0, 0))

    spikes_p, sumspike_p = pl.pallas_call(
        kernel,
        out_shape=(
            jax.ShapeDtypeStruct((T, b_pad, out_pad), spikes_dtype),
            jax.ShapeDtypeStruct((b_pad, out_pad), jnp.float32),
        ),
        grid_spec=pltpu.PrefetchScalarGridSpec(
            num_scalar_prefetch=0,
            grid=(n_tiles, n_chunks),
            in_specs=[
                x_spec,
                # W, b: same block for every chunk -> stay resident in VMEM
                pl.BlockSpec((in_pad, out_tile), lambda n, c: (0, n)),
                pl.BlockSpec((1, out_tile), lambda n, c: (0, n)),
            ],
            out_specs=(
                pl.BlockSpec((tc, b_pad, out_tile), lambda n, c: (c, 0, n)),
                # sumspike: constant block over c -> VMEM-resident accumulator
                pl.BlockSpec((b_pad, out_tile), lambda n, c: (0, n)),
            ),
            scratch_shapes=[
                pltpu.VMEM((b_pad, out_tile), jnp.float32),   # mem (spike is derived)
            ],
        ),
        compiler_params=pltpu.CompilerParams(
            dimension_semantics=("parallel", "arbitrary"),
            vmem_limit_bytes=64 * 1024 * 1024),
    )(xs_p, w_t, b_p)

    spikes = spikes_p[:, :B, :out_features]
    sumspike = sumspike_p[:B, :out_features]
    return spikes, sumspike


if __name__ == "__main__":
    # Small shapes consistent with the module: batch=2, in=32, out=32, T=8.
    batch_size = 2
    in_features = 32
    out_features = 32
    spike_window = 8

    key = jax.random.PRNGKey(0)
    k_w, k_b, k_x = jax.random.split(key, 3)

    # Deterministic nn.Linear-style init: U(-1/sqrt(in), 1/sqrt(in)).
    bound = 1.0 / (in_features ** 0.5)
    w = jax.random.uniform(k_w, (out_features, in_features), jnp.float32,
                           minval=-bound, maxval=bound)
    b = jax.random.uniform(k_b, (1, out_features), jnp.float32,
                           minval=-bound, maxval=bound)
    xs = jax.random.uniform(k_x, (spike_window, batch_size, in_features),
                            jnp.float32)

    def run_ref(xs_c, w_c):
        """Pure-JAX reference of the same recurrence (f32 accumulation)."""
        mem = jnp.zeros((batch_size, out_features), jnp.float32)
        spk = jnp.zeros((batch_size, out_features), jnp.float32)
        ssum = jnp.zeros((batch_size, out_features), jnp.float32)
        outs = []
        for t in range(spike_window):
            y = jnp.dot(xs_c[t], w_c.T, preferred_element_type=jnp.float32) + b
            mem = mem * DECAY * (1.0 - spk) + y
            spk = (mem > THRESH).astype(jnp.float32)
            ssum = ssum + spk
            outs.append(spk)
        return jnp.stack(outs), ssum

    # f32 path: bit-exact check against the f32 reference.
    fwd_f32 = jax.jit(functools.partial(fc_block_forward,
                                        compute_dtype=jnp.float32))
    spikes, sumspike = fwd_f32(xs, w, b)
    jax.block_until_ready((spikes, sumspike))

    spikes_ref, sum_ref = run_ref(xs, w)
    assert spikes.shape == (spike_window, batch_size, out_features)
    assert sumspike.shape == (batch_size, out_features)
    assert jnp.allclose(spikes, spikes_ref, atol=1e-5)
    assert jnp.allclose(sumspike, sum_ref, atol=1e-5)

    # Default path: bf16-fed MXU (f32 accumulate / state math), bf16 spikes out.
    # Spikes are exactly 0/1 so the bf16 output cast is lossless; compare the
    # spike pattern against a bf16-cast reference (agreement check, since the
    # hard threshold near 0.5 can flip for values within bf16 rounding error).
    fwd = jax.jit(functools.partial(fc_block_forward,
                                    spikes_dtype=jnp.bfloat16))
    spikes_b, sumspike_b = fwd(xs, w, b)
    jax.block_until_ready((spikes_b, sumspike_b))

    spikes_bref, _ = run_ref(xs.astype(jnp.bfloat16), w.astype(jnp.bfloat16))
    agree = jnp.mean((spikes_b.astype(jnp.float32) == spikes_bref)
                     .astype(jnp.float32))
    assert spikes_b.shape == (spike_window, batch_size, out_features)
    assert sumspike_b.shape == (batch_size, out_features)
    assert float(agree) >= 0.98, f"bf16 spike agreement too low: {float(agree)}"

    # TODO(synk): TrainingHook / FA_wrapper only alter the backward pass
    # (random feedback alignment); their forward is identity, so the per-step
    # kernel output is exactly `spike`. Dropout is disabled (`if False`) in the
    # original forward and is therefore omitted.
    print("KERNEL_OK")
</pallas_src>

<mosaic_0001>
module attributes {stable_mosaic.version = 11 : i64} {
  func.func @_fc_lif_chunk_kernel(%arg0: i32, %arg1: i32, %arg2: memref<8x8x128xf32, #tpu.memory_space<vmem>>, %arg3: memref<128x128xf32, #tpu.memory_space<vmem>>, %arg4: memref<1x128xf32, #tpu.memory_space<vmem>>, %arg5: memref<8x8x128xf32, #tpu.memory_space<vmem>>, %arg6: memref<8x128xf32, #tpu.memory_space<vmem>>, %arg7: memref<8x128xf32, #tpu.memory_space<vmem>>) attributes {dimension_semantics = [#tpu.dimension_semantics<parallel>, #tpu.dimension_semantics<arbitrary>], iteration_bounds = array<i64: 1, 1>, scalar_prefetch = 0 : i64, scratch_operands = 1 : i64, tpu.core_type = #tpu.core_type<tc>, window_params = [{transform_indices = @transform_0, window_bounds = array<i64: 8, 8, 128>}, {transform_indices = @transform_1, window_bounds = array<i64: 128, 128>}, {transform_indices = @transform_2, window_bounds = array<i64: 1, 128>}, {transform_indices = @transform_3, window_bounds = array<i64: 8, 8, 128>}, {transform_indices = @transform_4, window_bounds = array<i64: 8, 128>}]} {
    %c0_i32 = arith.constant 0 : i32
    %0 = arith.cmpi eq, %arg1, %c0_i32 : i32
    %1 = arith.extui %0 : i1 to i32
    %c0_i32_0 = arith.constant 0 : i32
    %2 = arith.cmpi ne, %1, %c0_i32_0 : i32
    scf.if %2 {
      %cst_57 = arith.constant 0.000000e+00 : f32
      %147 = vector.broadcast %cst_57 : f32 to vector<8x128xf32>
      %c0_58 = arith.constant 0 : index
      %c0_59 = arith.constant 0 : index
      %148 = vector.load %arg7[%c0_58, %c0_59] : memref<8x128xf32, #tpu.memory_space<vmem>>, vector<8x128xf32>
      tpu.vector_store %arg7[%c0_58, %c0_59], %147 {strides = array<i32>} : memref<8x128xf32, #tpu.memory_space<vmem>>, vector<8x128xf32>,
      %cst_60 = arith.constant 0.000000e+00 : f32
      %149 = vector.broadcast %cst_60 : f32 to vector<8x128xf32>
      %c0_61 = arith.constant 0 : index
      %c0_62 = arith.constant 0 : index
      %150 = vector.load %arg6[%c0_61, %c0_62] : memref<8x128xf32, #tpu.memory_space<vmem>>, vector<8x128xf32>
      tpu.vector_store %arg6[%c0_61, %c0_62], %149 {strides = array<i32>} : memref<8x128xf32, #tpu.memory_space<vmem>>, vector<8x128xf32>,
    } else {
    }
    %c0 = arith.constant 0 : index
    %c0_1 = arith.constant 0 : index
    %c0_2 = arith.constant 0 : index
    %3 = vector.load %arg2[%c0, %c0_1, %c0_2] : memref<8x8x128xf32, #tpu.memory_space<vmem>>, vector<8x8x128xf32>
    %4 = vector.shape_cast %3 : vector<8x8x128xf32> to vector<64x128xf32>
    %c0_3 = arith.constant 0 : index
    %c0_4 = arith.constant 0 : index
    %5 = vector.load %arg3[%c0_3, %c0_4] : memref<128x128xf32, #tpu.memory_space<vmem>>, vector<128x128xf32>
    %cst = arith.constant dense<0.000000e+00> : vector<64x128xf32>
    %6 = tpu.matmul %4, %5, %cst {dimension_numbers = #tpu.dot_dimension_numbers<[1], [0], [0], [1], [0, 0, 1, 1], [], []>} : vector<64x128xf32>, vector<128x128xf32>, vector<64x128xf32> -> vector<64x128xf32>
    %c0_5 = arith.constant 0 : index
    %c0_6 = arith.constant 0 : index
    %7 = vector.load %arg4[%c0_5, %c0_6] : memref<1x128xf32, #tpu.memory_space<vmem>>, vector<1x128xf32>
    %8 = vector.broadcast %7 : vector<1x128xf32> to vector<64x128xf32>
    %9 = arith.addf %6, %8 : vector<64x128xf32>
    %10 = vector.shape_cast %9 : vector<64x128xf32> to vector<8x8x128xf32>
    %c0_7 = arith.constant 0 : index
    %c0_8 = arith.constant 0 : index
    %11 = vector.load %arg7[%c0_7, %c0_8] : memref<8x128xf32, #tpu.memory_space<vmem>>, vector<8x128xf32>
    %cst_9 = arith.constant 5.000000e-01 : f32
    %12 = vector.broadcast %cst_9 : f32 to vector<8x128xf32>
    %13 = arith.cmpf ogt, %11, %12 : vector<8x128xf32>
    %14 = arith.extui %13 : vector<8x128xi1> to vector<8x128xi32>
    %15 = arith.sitofp %14 : vector<8x128xi32> to vector<8x128xf32>
    %c0_10 = arith.constant 0 : index
    %c0_11 = arith.constant 0 : index
    %16 = vector.load %arg6[%c0_10, %c0_11] : memref<8x128xf32, #tpu.memory_space<vmem>>, vector<8x128xf32>
    %cst_12 = arith.constant 1.000000e+00 : f32
    %17 = vector.broadcast %cst_12 : f32 to vector<8x128xf32>
    %18 = arith.subf %17, %15 : vector<8x128xf32>
    %cst_13 = arith.constant 2.000000e-01 : f32
    %19 = vector.broadcast %cst_13 : f32 to vector<8x128xf32>
    %20 = arith.mulf %19, %18 : vector<8x128xf32>
    %21 = arith.mulf %11, %20 : vector<8x128xf32>
    %22 = vector.extract_strided_slice %10 {offsets = [0, 0, 0], sizes = [1, 8, 128], strides = [1, 1, 1]} : vector<8x8x128xf32> to vector<1x8x128xf32>
    %23 = vector.shape_cast %22 : vector<1x8x128xf32> to vector<8x128xf32>
    %24 = arith.addf %21, %23 : vector<8x128xf32>
    %cst_14 = arith.constant 5.000000e-01 : f32
    %25 = vector.broadcast %cst_14 : f32 to vector<8x128xf32>
    %26 = arith.cmpf ogt, %24, %25 : vector<8x128xf32>
    %27 = arith.extui %26 : vector<8x128xi1> to vector<8x128xi32>
    %28 = arith.sitofp %27 : vector<8x128xi32> to vector<8x128xf32>
    %29 = arith.addf %16, %28 : vector<8x128xf32>
    %c0_15 = arith.constant 0 : index
    %c0_16 = arith.constant 0 : index
    %c0_17 = arith.constant 0 : index
    %30 = vector.load %arg5[%c0_15, %c0_16, %c0_17] : memref<8x8x128xf32, #tpu.memory_space<vmem>>, vector<1x8x128xf32>
    %31 = vector.shape_cast %30 : vector<1x8x128xf32> to vector<8x128xf32>
    %32 = vector.shape_cast %28 : vector<8x128xf32> to vector<1x8x128xf32>
    tpu.vector_store %arg5[%c0_15, %c0_16, %c0_17], %32 {strides = array<i32>} : memref<8x8x128xf32, #tpu.memory_space<vmem>>, vector<1x8x128xf32>,
    %cst_18 = arith.constant 1.000000e+00 : f32
    %33 = vector.broadcast %cst_18 : f32 to vector<8x128xf32>
    %34 = arith.subf %33, %28 : vector<8x128xf32>
    %cst_19 = arith.constant 2.000000e-01 : f32
    %35 = vector.broadcast %cst_19 : f32 to vector<8x128xf32>
    %36 = arith.mulf %35, %34 : vector<8x128xf32>
    %37 = arith.mulf %24, %36 : vector<8x128xf32>
    %38 = vector.extract_strided_slice %10 {offsets = [1, 0, 0], sizes = [1, 8, 128], strides = [1, 1, 1]} : vector<8x8x128xf32> to vector<1x8x128xf32>
    %39 = vector.shape_cast %38 : vector<1x8x128xf32> to vector<8x128xf32>
    %40 = arith.addf %37, %39 : vector<8x128xf32>
    %cst_20 = arith.constant 5.000000e-01 : f32
    %41 = vector.broadcast %cst_20 : f32 to vector<8x128xf32>
    %42 = arith.cmpf ogt, %40, %41 : vector<8x128xf32>
    %43 = arith.extui %42 : vector<8x128xi1> to vector<8x128xi32>
    %44 = arith.sitofp %43 : vector<8x128xi32> to vector<8x128xf32>
    %45 = arith.addf %29, %44 : vector<8x128xf32>
    %c1 = arith.constant 1 : index
    %c0_21 = arith.constant 0 : index
    %c0_22 = arith.constant 0 : index
    %46 = vector.load %arg5[%c1, %c0_21, %c0_22] : memref<8x8x128xf32, #tpu.memory_space<vmem>>, vector<1x8x128xf32>
    %47 = vector.shape_cast %46 : vector<1x8x128xf32> to vector<8x128xf32>
    %48 = vector.shape_cast %44 : vector<8x128xf32> to vector<1x8x128xf32>
    tpu.vector_store %arg5[%c1, %c0_21, %c0_22], %48 {strides = array<i32>} : memref<8x8x128xf32, #tpu.memory_space<vmem>>, vector<1x8x128xf32>,
    %cst_23 = arith.constant 1.000000e+00 : f32
    %49 = vector.broadcast %cst_23 : f32 to vector<8x128xf32>
    %50 = arith.subf %49, %44 : vector<8x128xf32>
    %cst_24 = arith.constant 2.000000e-01 : f32
    %51 = vector.broadcast %cst_24 : f32 to vector<8x128xf32>
    %52 = arith.mulf %51, %50 : vector<8x128xf32>
    %53 = arith.mulf %40, %52 : vector<8x128xf32>
    %54 = vector.extract_strided_slice %10 {offsets = [2, 0, 0], sizes = [1, 8, 128], strides = [1, 1, 1]} : vector<8x8x128xf32> to vector<1x8x128xf32>
    %55 = vector.shape_cast %54 : vector<1x8x128xf32> to vector<8x128xf32>
    %56 = arith.addf %53, %55 : vector<8x128xf32>
    %cst_25 = arith.constant 5.000000e-01 : f32
    %57 = vector.broadcast %cst_25 : f32 to vector<8x128xf32>
    %58 = arith.cmpf ogt, %56, %57 : vector<8x128xf32>
    %59 = arith.extui %58 : vector<8x128xi1> to vector<8x128xi32>
    %60 = arith.sitofp %59 : vector<8x128xi32> to vector<8x128xf32>
    %61 = arith.addf %45, %60 : vector<8x128xf32>
    %c2 = arith.constant 2 : index
    %c0_26 = arith.constant 0 : index
    %c0_27 = arith.constant 0 : index
    %62 = vector.load %arg5[%c2, %c0_26, %c0_27] : memref<8x8x128xf32, #tpu.memory_space<vmem>>, vector<1x8x128xf32>
    %63 = vector.shape_cast %62 : vector<1x8x128xf32> to vector<8x128xf32>
    %64 = vector.shape_cast %60 : vector<8x128xf32> to vector<1x8x128xf32>
    tpu.vector_store %arg5[%c2, %c0_26, %c0_27], %64 {strides = array<i32>} : memref<8x8x128xf32, #tpu.memory_space<vmem>>, vector<1x8x128xf32>,
    %cst_28 = arith.constant 1.000000e+00 : f32
    %65 = vector.broadcast %cst_28 : f32 to vector<8x128xf32>
    %66 = arith.subf %65, %60 : vector<8x128xf32>
    %cst_29 = arith.constant 2.000000e-01 : f32
    %67 = vector.broadcast %cst_29 : f32 to vector<8x128xf32>
    %68 = arith.mulf %67, %66 : vector<8x128xf32>
    %69 = arith.mulf %56, %68 : vector<8x128xf32>
    %70 = vector.extract_strided_slice %10 {offsets = [3, 0, 0], sizes = [1, 8, 128], strides = [1, 1, 1]} : vector<8x8x128xf32> to vector<1x8x128xf32>
    %71 = vector.shape_cast %70 : vector<1x8x128xf32> to vector<8x128xf32>
    %72 = arith.addf %69, %71 : vector<8x128xf32>
    %cst_30 = arith.constant 5.000000e-01 : f32
    %73 = vector.broadcast %cst_30 : f32 to vector<8x128xf32>
    %74 = arith.cmpf ogt, %72, %73 : vector<8x128xf32>
    %75 = arith.extui %74 : vector<8x128xi1> to vector<8x128xi32>
    %76 = arith.sitofp %75 : vector<8x128xi32> to vector<8x128xf32>
    %77 = arith.addf %61, %76 : vector<8x128xf32>
    %c3 = arith.constant 3 : index
    %c0_31 = arith.constant 0 : index
    %c0_32 = arith.constant 0 : index
    %78 = vector.load %arg5[%c3, %c0_31, %c0_32] : memref<8x8x128xf32, #tpu.memory_space<vmem>>, vector<1x8x128xf32>
    %79 = vector.shape_cast %78 : vector<1x8x128xf32> to vector<8x128xf32>
    %80 = vector.shape_cast %76 : vector<8x128xf32> to vector<1x8x128xf32>
    tpu.vector_store %arg5[%c3, %c0_31, %c0_32], %80 {strides = array<i32>} : memref<8x8x128xf32, #tpu.memory_space<vmem>>, vector<1x8x128xf32>,
    %cst_33 = arith.constant 1.000000e+00 : f32
    %81 = vector.broadcast %cst_33 : f32 to vector<8x128xf32>
    %82 = arith.subf %81, %76 : vector<8x128xf32>
    %cst_34 = arith.constant 2.000000e-01 : f32
    %83 = vector.broadcast %cst_34 : f32 to vector<8x128xf32>
    %84 = arith.mulf %83, %82 : vector<8x128xf32>
    %85 = arith.mulf %72, %84 : vector<8x128xf32>
    %86 = vector.extract_strided_slice %10 {offsets = [4, 0, 0], sizes = [1, 8, 128], strides = [1, 1, 1]} : vector<8x8x128xf32> to vector<1x8x128xf32>
    %87 = vector.shape_cast %86 : vector<1x8x128xf32> to vector<8x128xf32>
    %88 = arith.addf %85, %87 : vector<8x128xf32>
    %cst_35 = arith.constant 5.000000e-01 : f32
    %89 = vector.broadcast %cst_35 : f32 to vector<8x128xf32>
    %90 = arith.cmpf ogt, %88, %89 : vector<8x128xf32>
    %91 = arith.extui %90 : vector<8x128xi1> to vector<8x128xi32>
    %92 = arith.sitofp %91 : vector<8x128xi32> to vector<8x128xf32>
    %93 = arith.addf %77, %92 : vector<8x128xf32>
    %c4 = arith.constant 4 : index
    %c0_36 = arith.constant 0 : index
    %c0_37 = arith.constant 0 : index
    %94 = vector.load %arg5[%c4, %c0_36, %c0_37] : memref<8x8x128xf32, #tpu.memory_space<vmem>>, vector<1x8x128xf32>
    %95 = vector.shape_cast %94 : vector<1x8x128xf32> to vector<8x128xf32>
    %96 = vector.shape_cast %92 : vector<8x128xf32> to vector<1x8x128xf32>
    tpu.vector_store %arg5[%c4, %c0_36, %c0_37], %96 {strides = array<i32>} : memref<8x8x128xf32, #tpu.memory_space<vmem>>, vector<1x8x128xf32>,
    %cst_38 = arith.constant 1.000000e+00 : f32
    %97 = vector.broadcast %cst_38 : f32 to vector<8x128xf32>
    %98 = arith.subf %97, %92 : vector<8x128xf32>
    %cst_39 = arith.constant 2.000000e-01 : f32
    %99 = vector.broadcast %cst_39 : f32 to vector<8x128xf32>
    %100 = arith.mulf %99, %98 : vector<8x128xf32>
    %101 = arith.mulf %88, %100 : vector<8x128xf32>
    %102 = vector.extract_strided_slice %10 {offsets = [5, 0, 0], sizes = [1, 8, 128], strides = [1, 1, 1]} : vector<8x8x128xf32> to vector<1x8x128xf32>
    %103 = vector.shape_cast %102 : vector<1x8x128xf32> to vector<8x128xf32>
    %104 = arith.addf %101, %103 : vector<8x128xf32>
    %cst_40 = arith.constant 5.000000e-01 : f32
    %105 = vector.broadcast %cst_40 : f32 to vector<8x128xf32>
    %106 = arith.cmpf ogt, %104, %105 : vector<8x128xf32>
    %107 = arith.extui %106 : vector<8x128xi1> to vector<8x128xi32>
    %108 = arith.sitofp %107 : vector<8x128xi32> to vector<8x128xf32>
    %109 = arith.addf %93, %108 : vector<8x128xf32>
    %c5 = arith.constant 5 : index
    %c0_41 = arith.constant 0 : index
    %c0_42 = arith.constant 0 : index
    %110 = vector.load %arg5[%c5, %c0_41, %c0_42] : memref<8x8x128xf32, #tpu.memory_space<vmem>>, vector<1x8x128xf32>
    %111 = vector.shape_cast %110 : vector<1x8x128xf32> to vector<8x128xf32>
    %112 = vector.shape_cast %108 : vector<8x128xf32> to vector<1x8x128xf32>
    tpu.vector_store %arg5[%c5, %c0_41, %c0_42], %112 {strides = array<i32>} : memref<8x8x128xf32, #tpu.memory_space<vmem>>, vector<1x8x128xf32>,
    %cst_43 = arith.constant 1.000000e+00 : f32
    %113 = vector.broadcast %cst_43 : f32 to vector<8x128xf32>
    %114 = arith.subf %113, %108 : vector<8x128xf32>
    %cst_44 = arith.constant 2.000000e-01 : f32
    %115 = vector.broadcast %cst_44 : f32 to vector<8x128xf32>
    %116 = arith.mulf %115, %114 : vector<8x128xf32>
    %117 = arith.mulf %104, %116 : vector<8x128xf32>
    %118 = vector.extract_strided_slice %10 {offsets = [6, 0, 0], sizes = [1, 8, 128], strides = [1, 1, 1]} : vector<8x8x128xf32> to vector<1x8x128xf32>
    %119 = vector.shape_cast %118 : vector<1x8x128xf32> to vector<8x128xf32>
    %120 = arith.addf %117, %119 : vector<8x128xf32>
    %cst_45 = arith.constant 5.000000e-01 : f32
    %121 = vector.broadcast %cst_45 : f32 to vector<8x128xf32>
    %122 = arith.cmpf ogt, %120, %121 : vector<8x128xf32>
    %123 = arith.extui %122 : vector<8x128xi1> to vector<8x128xi32>
    %124 = arith.sitofp %123 : vector<8x128xi32> to vector<8x128xf32>
    %125 = arith.addf %109, %124 : vector<8x128xf32>
    %c6 = arith.constant 6 : index
    %c0_46 = arith.constant 0 : index
    %c0_47 = arith.constant 0 : index
    %126 = vector.load %arg5[%c6, %c0_46, %c0_47] : memref<8x8x128xf32, #tpu.memory_space<vmem>>, vector<1x8x128xf32>
    %127 = vector.shape_cast %126 : vector<1x8x128xf32> to vector<8x128xf32>
    %128 = vector.shape_cast %124 : vector<8x128xf32> to vector<1x8x128xf32>
    tpu.vector_store %arg5[%c6, %c0_46, %c0_47], %128 {strides = array<i32>} : memref<8x8x128xf32, #tpu.memory_space<vmem>>, vector<1x8x128xf32>,
    %cst_48 = arith.constant 1.000000e+00 : f32
    %129 = vector.broadcast %cst_48 : f32 to vector<8x128xf32>
    %130 = arith.subf %129, %124 : vector<8x128xf32>
    %cst_49 = arith.constant 2.000000e-01 : f32
    %131 = vector.broadcast %cst_49 : f32 to vector<8x128xf32>
    %132 = arith.mulf %131, %130 : vector<8x128xf32>
    %133 = arith.mulf %120, %132 : vector<8x128xf32>
    %134 = vector.extract_strided_slice %10 {offsets = [7, 0, 0], sizes = [1, 8, 128], strides = [1, 1, 1]} : vector<8x8x128xf32> to vector<1x8x128xf32>
    %135 = vector.shape_cast %134 : vector<1x8x128xf32> to vector<8x128xf32>
    %136 = arith.addf %133, %135 : vector<8x128xf32>
    %cst_50 = arith.constant 5.000000e-01 : f32
    %137 = vector.broadcast %cst_50 : f32 to vector<8x128xf32>
    %138 = arith.cmpf ogt, %136, %137 : vector<8x128xf32>
    %139 = arith.extui %138 : vector<8x128xi1> to vector<8x128xi32>
    %140 = arith.sitofp %139 : vector<8x128xi32> to vector<8x128xf32>
    %141 = arith.addf %125, %140 : vector<8x128xf32>
    %c7 = arith.constant 7 : index
    %c0_51 = arith.constant 0 : index
    %c0_52 = arith.constant 0 : index
    %142 = vector.load %arg5[%c7, %c0_51, %c0_52] : memref<8x8x128xf32, #tpu.memory_space<vmem>>, vector<1x8x128xf32>
    %143 = vector.shape_cast %142 : vector<1x8x128xf32> to vector<8x128xf32>
    %144 = vector.shape_cast %140 : vector<8x128xf32> to vector<1x8x128xf32>
    tpu.vector_store %arg5[%c7, %c0_51, %c0_52], %144 {strides = array<i32>} : memref<8x8x128xf32, #tpu.memory_space<vmem>>, vector<1x8x128xf32>,
    %c0_53 = arith.constant 0 : index
    %c0_54 = arith.constant 0 : index
    %145 = vector.load %arg7[%c0_53, %c0_54] : memref<8x128xf32, #tpu.memory_space<vmem>>, vector<8x128xf32>
    tpu.vector_store %arg7[%c0_53, %c0_54], %136 {strides = array<i32>} : memref<8x128xf32, #tpu.memory_space<vmem>>, vector<8x128xf32>,
    %c0_55 = arith.constant 0 : index
    %c0_56 = arith.constant 0 : index
    %146 = vector.load %arg6[%c0_55, %c0_56] : memref<8x128xf32, #tpu.memory_space<vmem>>, vector<8x128xf32>
    tpu.vector_store %arg6[%c0_55, %c0_56], %141 {strides = array<i32>} : memref<8x128xf32, #tpu.memory_space<vmem>>, vector<8x128xf32>,
    return
  }
  func.func @transform_0(%arg0: i32, %arg1: i32) -> (i32, i32, i32) {
    %c0_i32 = arith.constant 0 : i32
    %c0_i32_0 = arith.constant 0 : i32
    %c0_i32_1 = arith.constant 0 : i32
    return %arg1, %c0_i32, %c0_i32_0 : i32, i32, i32
  }
  func.func @transform_1(%arg0: i32, %arg1: i32) -> (i32, i32) {
    %c0_i32 = arith.constant 0 : i32
    %c0_i32_0 = arith.constant 0 : i32
    return %c0_i32, %arg0 : i32, i32
  }
  func.func @transform_2(%arg0: i32, %arg1: i32) -> (i32, i32) {
    %c0_i32 = arith.constant 0 : i32
    %c0_i32_0 = arith.constant 0 : i32
    return %c0_i32, %arg0 : i32, i32
  }
  func.func @transform_3(%arg0: i32, %arg1: i32) -> (i32, i32, i32) {
    %c0_i32 = arith.constant 0 : i32
    %c0_i32_0 = arith.constant 0 : i32
    return %arg1, %c0_i32, %arg0 : i32, i32, i32
  }
  func.func @transform_4(%arg0: i32, %arg1: i32) -> (i32, i32) {
    %c0_i32 = arith.constant 0 : i32
    %c0_i32_0 = arith.constant 0 : i32
    return %c0_i32, %arg0 : i32, i32
  }
}

</mosaic_0001>

<llo_original>
// kernel: fc_block_forward.1
$region0: #{fc_block_forward.1}
  #allocation0 [shape = 'u32[]', space=smem, size = 0x4, offset = 0x4, fixed_abs, tag = 'smem constant byte address 0x4 - core index']
  #allocation1 [shape = 'u32[144,128]{1,0:T(1,128)}', space=vmem, size = 0x12000, scoped, tag = 'internal scratch']
  #allocation2 [shape = 'f32[8,128]{1,0:T(8,128)}', space=vmem, size = 0x1000, scoped, tag = 'scratch operand']
  %s0 = inlined_call_operand.hbm [shape: f32[8,8,128], index: 0, kind: input, shape index: {}]
  %s1 = inlined_call_operand.hbm [shape: f32[128,128], index: 1, kind: input, shape index: {}]
  %s2 = inlined_call_operand.hbm [shape: f32[1,128], index: 2, kind: input, shape index: {}]
  %s3 = inlined_call_operand.hbm [shape: f32[8,8,128], index: 3, kind: output, shape index: {0}]
  %s4 = inlined_call_operand.hbm [shape: f32[8,128], index: 4, kind: output, shape index: {1}]
  %5 = xla_tuple %s3, %s4
  %s6 = sld [smem:[#allocation0]]
  $region46: #{fc_block_forward.1} parent=0
    _
  %s8 = ssub.s32 1, %s6
  %s9 = scalar_select 0, %s8, %s6
  $region1: #{fc_block_forward.1} parent=0
    #allocation3 [shape = 'u8[32768]{0}', space=vmem, size = 0x8000, scoped, tag = 'input window, operand 0, single buffered']
    #allocation4 [shape = 's32[1]{0}', space=sflag, size = 0x4, scoped, tag = 'scoped memory for fc_block_forward.1']
    #allocation5 [shape = 's32[1]{0}', space=sflag, size = 0x4, scoped, tag = 'scoped memory for fc_block_forward.1']
    #allocation6 [shape = 'u8[65536]{0}', space=vmem, size = 0x10000, scoped, tag = 'input window, operand 1, single buffered']
    #allocation7 [shape = 's32[1]{0}', space=sflag, size = 0x4, scoped, tag = 'scoped memory for fc_block_forward.1']
    #allocation8 [shape = 'u8[512]{0}', space=vmem, size = 0x400, scoped, tag = 'input window, operand 2, single buffered']
    #allocation9 [shape = 'u8[32768]{0}', space=vmem, size = 0x8000, scoped, tag = 'output window, operand 0, single buffered']
    #allocation10 [shape = 'u8[4096]{0}', space=vmem, size = 0x1000, scoped, tag = 'output window, operand 1, single buffered']
    #allocation11 [shape = 's32[1]{0}', space=sflag, size = 0x4, scoped, tag = 'scoped memory for fc_block_forward.1']
    %10 = vsyncpa [#allocation4], 0
    %11 = vsyncpa [#allocation7], 0
    %12 = vsyncpa [#allocation5], 0
    %13 = vsyncpa [#allocation11], 0
    // Predicated region
    $region2: #{fc_block_forward.1} parent=1 // pred_check
      _
    $region3: #{fc_block_forward.1} parent=1 // pred_check_branch
      %15 = sbr.rel (0) target = $region5
    $region4: #{fc_block_forward.1} parent=1 // pred_region
      %s17 = ssub.s32 1024, 1024
      %18 = vsyncadd [#allocation4], %s17
      %s19 = sshll.u32 [#allocation3], 4
      %s20 = int_to_ptr.vmem [resolvable:$true] %s19
      %25 = dma.hbm_to_vmem [thread:$0]  %s0, 1024, %s20, [#allocation4], 128, 128, 8
    $region5: #{fc_block_forward.1} parent=1 // pred_fallthru
      _
    // Predicated region
    $region6: #{fc_block_forward.1} parent=1 // pred_check
      _
    $region7: #{fc_block_forward.1} parent=1 // pred_check_branch
      %27 = sbr.rel (0) target = $region9
    $region8: #{fc_block_forward.1} parent=1 // pred_region
      %s29 = ssub.s32 2048, 2048
      %30 = vsyncadd [#allocation7], %s29
      %s31 = sshll.u32 [#allocation6], 4
      %s32 = int_to_ptr.vmem [resolvable:$true] %s31
      %37 = dma.hbm_to_vmem [thread:$0]  %s1, 2048, %s32, [#allocation7], 128, 128, 8
    $region9: #{fc_block_forward.1} parent=1 // pred_fallthru
      _
    // Predicated region
    $region10: #{fc_block_forward.1} parent=1 // pred_check
      _
    $region11: #{fc_block_forward.1} parent=1 // pred_check_branch
      %39 = sbr.rel (0) target = $region13
    $region12: #{fc_block_forward.1} parent=1 // pred_region
      %s41 = ssub.s32 16, 16
      %42 = vsyncadd [#allocation7], %s41
      %s44 = sshll.u32 [#allocation8], 4
      %s45 = int_to_ptr.vmem [resolvable:$true] %s44
      %47 = dma.hbm_to_vmem [thread:$0]  %s2, 16, %s45, [#allocation7]
    $region13: #{fc_block_forward.1} parent=1 // pred_fallthru
      _
    // Predicated region
    $region14: #{fc_block_forward.1} parent=1 // pred_check
      _
    $region15: #{fc_block_forward.1} parent=1 // pred_check_branch
      %49 = sbr.rel (0) target = $region17
    $region16: #{fc_block_forward.1} parent=1 // pred_region
      %50 = dma.done [#allocation4], 1024
    $region17: #{fc_block_forward.1} parent=1 // pred_fallthru
      _
    // Predicated region
    $region18: #{fc_block_forward.1} parent=1 // pred_check
      _
    $region19: #{fc_block_forward.1} parent=1 // pred_check_branch
      %52 = sbr.rel (0) target = $region21
    $region20: #{fc_block_forward.1} parent=1 // pred_region
      %53 = dma.done [#allocation7], 2048
    $region21: #{fc_block_forward.1} parent=1 // pred_fallthru
      _
    // Predicated region
    $region22: #{fc_block_forward.1} parent=1 // pred_check
      _
    $region23: #{fc_block_forward.1} parent=1 // pred_check_branch
      %55 = sbr.rel (0) target = $region25
    $region24: #{fc_block_forward.1} parent=1 // pred_region
      %56 = dma.done [#allocation7], 16
    $region25: #{fc_block_forward.1} parent=1 // pred_fallthru
      _
    %p57 = scmp.eq.s32.totalorder 0, 0
    // Predicated region
    $region26: #{fc_block_forward.1} parent=1 // pred_check
      %p58 = pneg %p57
    $region27: #{fc_block_forward.1} parent=1 // pred_check_branch
      %60 = sbr.rel (%p58) target = $region29
    $region28: #{fc_block_forward.1} parent=1 // pred_region
      %61 = vst [vmem:[#allocation2] sm:$0xff] 0.0
      %62 = vst [vmem:[#allocation10] sm:$0xff] 0.0
    $region29: #{fc_block_forward.1} parent=1 // pred_fallthru
      _
    %v63 = vld [vmem:[#allocation3] sm:$0xff]
    %v64 = vld [vmem:[#allocation3 + $0x8] sm:$0xff]
    %v65 = vld [vmem:[#allocation3 + $0x10] sm:$0xff]
    %v66 = vld [vmem:[#allocation3 + $0x18] sm:$0xff]
    %v67 = vld [vmem:[#allocation3 + $0x20] sm:$0xff]
    %v68 = vld [vmem:[#allocation3 + $0x28] sm:$0xff]
    %v69 = vld [vmem:[#allocation3 + $0x30] sm:$0xff]
    %v70 = vld [vmem:[#allocation3 + $0x38] sm:$0xff]
    %v71 = vld [vmem:[#allocation6] sm:$0xff]
    %v72 = vld [vmem:[#allocation6 + $0x8] sm:$0xff]
    %v73 = vld [vmem:[#allocation6 + $0x10] sm:$0xff]
    %v74 = vld [vmem:[#allocation6 + $0x18] sm:$0xff]
    %v75 = vld [vmem:[#allocation6 + $0x20] sm:$0xff]
    %v76 = vld [vmem:[#allocation6 + $0x28] sm:$0xff]
    %v77 = vld [vmem:[#allocation6 + $0x30] sm:$0xff]
    %v78 = vld [vmem:[#allocation6 + $0x38] sm:$0xff]
    %v79 = vld [vmem:[#allocation6 + $0x40] sm:$0xff]
    %v80 = vld [vmem:[#allocation6 + $0x48] sm:$0xff]
    %v81 = vld [vmem:[#allocation6 + $0x50] sm:$0xff]
    %v82 = vld [vmem:[#allocation6 + $0x58] sm:$0xff]
    %v83 = vld [vmem:[#allocation6 + $0x60] sm:$0xff]
    %v84 = vld [vmem:[#allocation6 + $0x68] sm:$0xff]
    %v85 = vld [vmem:[#allocation6 + $0x70] sm:$0xff]
    %v86 = vld [vmem:[#allocation6 + $0x78] sm:$0xff]
    %v87 = vld [vmem:[#allocation8] sm:$0x1]
    %v89 = vlaneseq
    %v90 = vshrl.u32 %v89, 7
    %v91 = vsub.s32 0, %v90
    %v92 = vrot.slane %v87, %v91
    %94 = vmatprep.subr.mxu0 0.0
    %95 = vmatpush1.msra.mxu0 %v71
    %96 = vmatprep.subr.mxu0 0.0
    %97 = vmatpush1.msra.mxu0 %v72
    %98 = vmatprep.subr.mxu0 0.0
    %99 = vmatpush1.msra.mxu0 %v73
    %100 = vmatprep.subr.mxu0 0.0
    %101 = vmatpush1.msra.mxu0 %v74
    %102 = vmatprep.subr.mxu0 0.0
    %103 = vmatpush1.msra.mxu0 %v75
    %104 = vmatprep.subr.mxu0 0.0
    %105 = vmatpush1.msra.mxu0 %v76
    %106 = vmatprep.subr.mxu0 0.0
    %107 = vmatpush1.msra.mxu0 %v77
    %108 = vmatprep.subr.mxu0 0.0
    %109 = vmatpush1.msra.mxu0 %v78
    %110 = vmatprep.subr.mxu0 0.0
    %111 = vmatpush1.msra.mxu0 %v79
    %112 = vmatprep.subr.mxu0 0.0
    %113 = vmatpush1.msra.mxu0 %v80
    %114 = vmatprep.subr.mxu0 0.0
    %115 = vmatpush1.msra.mxu0 %v81
    %116 = vmatprep.subr.mxu0 0.0
    %117 = vmatpush1.msra.mxu0 %v82
    %118 = vmatprep.subr.mxu0 0.0
    %119 = vmatpush1.msra.mxu0 %v83
    %120 = vmatprep.subr.mxu0 0.0
    %121 = vmatpush1.msra.mxu0 %v84
    %122 = vmatprep.subr.mxu0 0.0
    %123 = vmatpush1.msra.mxu0 %v85
    %124 = vmatprep.subr.mxu0 0.0
    %125 = vmatpush1.msra.mxu0 %v86
    %126 = vmatprep.subr.mxu0 0.0
    %127 = vmatpush1.msra.mxu0 0.0
    %128 = vmatprep.subr.mxu0 0.0
    %129 = vmatpush1.msra.mxu0 0.0
    %130 = vmatprep.subr.mxu0 0.0
    %131 = vmatpush1.msra.mxu0 0.0
    %132 = vmatprep.subr.mxu0 0.0
    %133 = vmatpush1.msra.mxu0 0.0
    %134 = vmatprep.subr.mxu0 0.0
    %135 = vmatpush1.msra.mxu0 0.0
    %136 = vmatprep.subr.mxu0 0.0
    %137 = vmatpush1.msra.mxu0 0.0
    %138 = vmatprep.subr.mxu0 0.0
    %139 = vmatpush1.msra.mxu0 0.0
    %140 = vmatprep.subr.mxu0 0.0
    %141 = vmatpush1.msra.mxu0 0.0
    %142 = vmatprep.subr.mxu0 0.0
    %143 = vmatpush1.msra.mxu0 0.0
    %144 = vmatprep.subr.mxu0 0.0
    %145 = vmatpush1.msra.mxu0 0.0
    %146 = vmatprep.subr.mxu0 0.0
    %147 = vmatpush1.msra.mxu0 0.0
    %148 = vmatprep.subr.mxu0 0.0
    %149 = vmatpush1.msra.mxu0 0.0
    %150 = vmatprep.subr.mxu0 0.0
    %151 = vmatpush1.msra.mxu0 0.0
    %152 = vmatprep.subr.mxu0 0.0
    %153 = vmatpush1.msra.mxu0 0.0
    %154 = vmatprep.subr.mxu0 0.0
    %155 = vmatpush1.msra.mxu0 0.0
    %156 = vmatprep.subr.mxu0 0.0
    %157 = vmatpush1.msra.mxu0 0.0
    %158 = vmatprep.mubr.f32.mxu0 0.0
    %159 = vmatmul.mubr.f32.gmra.mrb[0].mxu0 %v63
    %v160 = vpop.f32.mrb[0].mxu0
    %v161 = vadd.f32 %v92, %v160
    %v162 = vpop.f32.mrb[0].mxu0
    %163 = vmatprep.mubr.f32.mxu0 0.0
    %164 = vmatmul.mubr.f32.gmra.mrb[0].mxu0 %v64
    %v165 = vpop.f32.mrb[0].mxu0
    %v166 = vadd.f32 %v92, %v165
    %v167 = vpop.f32.mrb[0].mxu0
    %168 = vmatprep.mubr.f32.mxu0 0.0
    %169 = vmatmul.mubr.f32.gmra.mrb[0].mxu0 %v65
    %v170 = vpop.f32.mrb[0].mxu0
    %v171 = vadd.f32 %v92, %v170
    %v172 = vpop.f32.mrb[0].mxu0
    %173 = vmatprep.mubr.f32.mxu0 0.0
    %174 = vmatmul.mubr.f32.gmra.mrb[0].mxu0 %v66
    %v175 = vpop.f32.mrb[0].mxu0
    %v176 = vadd.f32 %v92, %v175
    %v177 = vpop.f32.mrb[0].mxu0
    %178 = vmatprep.mubr.f32.mxu0 0.0
    %179 = vmatmul.mubr.f32.gmra.mrb[0].mxu0 %v67
    %v180 = vpop.f32.mrb[0].mxu0
    %v181 = vadd.f32 %v92, %v180
    %v182 = vpop.f32.mrb[0].mxu0
    %183 = vmatprep.mubr.f32.mxu0 0.0
    %184 = vmatmul.mubr.f32.gmra.mrb[0].mxu0 %v68
    %v185 = vpop.f32.mrb[0].mxu0
    %v186 = vadd.f32 %v92, %v185
    %v187 = vpop.f32.mrb[0].mxu0
    %188 = vmatprep.mubr.f32.mxu0 0.0
    %189 = vmatmul.mubr.f32.gmra.mrb[0].mxu0 %v69
    %v190 = vpop.f32.mrb[0].mxu0
    %v191 = vadd.f32 %v92, %v190
    %v192 = vpop.f32.mrb[0].mxu0
    %193 = vmatprep.mubr.f32.mxu0 0.0
    %194 = vmatmul.mubr.f32.gmra.mrb[0].mxu0 %v70
    %v195 = vpop.f32.mrb[0].mxu0
    %v196 = vadd.f32 %v92, %v195
    %v197 = vpop.f32.mrb[0].mxu0
    %198 = vdwg.mxu0
    %v199 = vld [vmem:[#allocation2] sm:$0xff]
    %vm200 = vcmp.gt.f32.partialorder %v199, 0.5
    %v201 = vsel %vm200, 1, 0
    %v202 = vcvt.s32.f32 %v201
    %v203 = vld [vmem:[#allocation10] sm:$0xff]
    %v204 = vsub.f32 1.0, %v202
    %v205 = vmul.f32 %v204, 0.2
    %v206 = vmul.f32 %v199, %v205
    %v207 = vadd.f32 %v206, %v161
    %vm208 = vcmp.gt.f32.partialorder %v207, 0.5
    %v209 = vsel %vm208, 1, 0
    %v210 = vcvt.s32.f32 %v209
    %v211 = vadd.f32 %v203, %v210
    %212 = vst [vmem:[#allocation9] sm:$0xff] %v210
    %v213 = vsub.f32 1.0, %v210
    %v214 = vmul.f32 %v213, 0.2
    %v215 = vmul.f32 %v207, %v214
    %v216 = vadd.f32 %v215, %v166
    %vm217 = vcmp.gt.f32.partialorder %v216, 0.5
    %v218 = vsel %vm217, 1, 0
    %v219 = vcvt.s32.f32 %v218
    %v220 = vadd.f32 %v211, %v219
    %s221 = scalar_lea.vmem [#allocation9], 8
    %222 = vst [vmem:[%s221] sm:$0xff] %v219
    %v223 = vsub.f32 1.0, %v219
    %v224 = vmul.f32 %v223, 0.2
    %v225 = vmul.f32 %v216, %v224
    %v226 = vadd.f32 %v225, %v171
    %vm227 = vcmp.gt.f32.partialorder %v226, 0.5
    %v228 = vsel %vm227, 1, 0
    %v229 = vcvt.s32.f32 %v228
    %v230 = vadd.f32 %v220, %v229
    %s231 = scalar_lea.vmem [#allocation9], 16
    %232 = vst [vmem:[%s231] sm:$0xff] %v229
    %v233 = vsub.f32 1.0, %v229
    %v234 = vmul.f32 %v233, 0.2
    %v235 = vmul.f32 %v226, %v234
    %v236 = vadd.f32 %v235, %v176
    %vm237 = vcmp.gt.f32.partialorder %v236, 0.5
    %v238 = vsel %vm237, 1, 0
    %v239 = vcvt.s32.f32 %v238
    %v240 = vadd.f32 %v230, %v239
    %s241 = scalar_lea.vmem [#allocation9], 24
    %242 = vst [vmem:[%s241] sm:$0xff] %v239
    %v243 = vsub.f32 1.0, %v239
    %v244 = vmul.f32 %v243, 0.2
    %v245 = vmul.f32 %v236, %v244
    %v246 = vadd.f32 %v245, %v181
    %vm247 = vcmp.gt.f32.partialorder %v246, 0.5
    %v248 = vsel %vm247, 1, 0
    %v249 = vcvt.s32.f32 %v248
    %v250 = vadd.f32 %v240, %v249
    %s251 = scalar_lea.vmem [#allocation9], 32
    %252 = vst [vmem:[%s251] sm:$0xff] %v249
    %v253 = vsub.f32 1.0, %v249
    %v254 = vmul.f32 %v253, 0.2
    %v255 = vmul.f32 %v246, %v254
    %v256 = vadd.f32 %v255, %v186
    %vm257 = vcmp.gt.f32.partialorder %v256, 0.5
    %v258 = vsel %vm257, 1, 0
    %v259 = vcvt.s32.f32 %v258
    %v260 = vadd.f32 %v250, %v259
    %s261 = scalar_lea.vmem [#allocation9], 40
    %262 = vst [vmem:[%s261] sm:$0xff] %v259
    %v263 = vsub.f32 1.0, %v259
    %v264 = vmul.f32 %v263, 0.2
    %v265 = vmul.f32 %v256, %v264
    %v266 = vadd.f32 %v265, %v191
    %vm267 = vcmp.gt.f32.partialorder %v266, 0.5
    %v268 = vsel %vm267, 1, 0
    %v269 = vcvt.s32.f32 %v268
    %v270 = vadd.f32 %v260, %v269
    %s271 = scalar_lea.vmem [#allocation9], 48
    %272 = vst [vmem:[%s271] sm:$0xff] %v269
    %v273 = vsub.f32 1.0, %v269
    %v274 = vmul.f32 %v273, 0.2
    %v275 = vmul.f32 %v266, %v274
    %v276 = vadd.f32 %v275, %v196
    %vm277 = vcmp.gt.f32.partialorder %v276, 0.5
    %v278 = vsel %vm277, 1, 0
    %v279 = vcvt.s32.f32 %v278
    %v280 = vadd.f32 %v270, %v279
    %s281 = scalar_lea.vmem [#allocation9], 56
    %282 = vst [vmem:[%s281] sm:$0xff] %v279
    %283 = vst [vmem:[#allocation2] sm:$0xff] %v276
    %284 = vst [vmem:[#allocation10] sm:$0xff] %v280
    // Predicated region
    $region30: #{fc_block_forward.1} parent=1 // pred_check
      _
    $region31: #{fc_block_forward.1} parent=1 // pred_check_branch
      %286 = sbr.rel (0) target = $region33
    $region32: #{fc_block_forward.1} parent=1 // pred_region
      %s288 = ssub.s32 1024, 1024
      %289 = vsyncadd [#allocation5], %s288
      %s290 = sshll.u32 [#allocation9], 4
      %s291 = int_to_ptr.vmem [resolvable:$true] %s290
      %296 = dma.vmem_to_hbm [thread:$0]  %s291, 1024, %s3, [#allocation5], 128, 128, 8
    $region33: #{fc_block_forward.1} parent=1 // pred_fallthru
      _
    // Predicated region
    $region34: #{fc_block_forward.1} parent=1 // pred_check
      _
    $region35: #{fc_block_forward.1} parent=1 // pred_check_branch
      %298 = sbr.rel (0) target = $region37
    $region36: #{fc_block_forward.1} parent=1 // pred_region
      %s300 = ssub.s32 128, 128
      %301 = vsyncadd [#allocation11], %s300
      %s303 = sshll.u32 [#allocation10], 4
      %s304 = int_to_ptr.vmem [resolvable:$true] %s303
      %306 = dma.vmem_to_hbm [thread:$0]  %s304, 128, %s4, [#allocation11]
    $region37: #{fc_block_forward.1} parent=1 // pred_fallthru
      _
    // Predicated region
    $region38: #{fc_block_forward.1} parent=1 // pred_check
      _
    $region39: #{fc_block_forward.1} parent=1 // pred_check_branch
      %308 = sbr.rel (0) target = $region41
    $region40: #{fc_block_forward.1} parent=1 // pred_region
      %309 = dma.done [#allocation5], 1024
    $region41: #{fc_block_forward.1} parent=1 // pred_fallthru
      _
    // Predicated region
    $region42: #{fc_block_forward.1} parent=1 // pred_check
      _
    $region43: #{fc_block_forward.1} parent=1 // pred_check_branch
      %311 = sbr.rel (0) target = $region45
    $region44: #{fc_block_forward.1} parent=1 // pred_region
      %312 = dma.done [#allocation11], 128
    $region45: #{fc_block_forward.1} parent=1 // pred_fallthru
      _
    %313 = vsyncpa [#allocation4], 1
    %314 = vsyncpa [#allocation7], 1
    %315 = vsyncpa [#allocation5], 1
    %316 = vsyncpa [#allocation11], 1

</llo_original>
